<compile_context>
chip_gen: v5e
topology: v5e:2x2
jax: 0.10.0
libtpu: 0.0.40
codegen_flags: <defaults>
</compile_context>

<pallas_src>
import functools

import jax
import jax.numpy as jnp
import numpy as np
from jax.experimental import pallas as pl
from jax.experimental.pallas import tpu as pltpu


def _round_up(x, m):
    return (x + m - 1) // m * m


def _make_textcnn_kernel(fs_max, l_pad, e_pad, n_pad):
    """Fused kernel: im2col conv (all filter sizes) + bias + ReLU + mask +
    max-over-time + FC, for one batch tile."""
    k_dim = fs_max * e_pad

    def kernel(emb_ref, wconv_ref, bconv_ref, mask_ref, wfc_ref, bfc_ref, out_ref):
        emb = emb_ref[...]                                  # (Bt, T_pad, E_pad) bf16
        bt = emb.shape[0]

        # im2col: concat fs_max time-shifted slices along the (lane-dense) feature
        # axis, then fold batch into M -> one big MXU matmul, K = fs_max * E_pad.
        windows = jnp.concatenate(
            [emb[:, k:k + l_pad, :] for k in range(fs_max)], axis=-1)
        lhs = windows.reshape(bt * l_pad, k_dim)            # (Bt*L_pad, fs_max*E_pad)

        acc = jnp.dot(lhs, wconv_ref[...],
                      preferred_element_type=jnp.float32)   # (Bt*L_pad, N_pad) f32

        # Fused epilogue: bias + ReLU, zero out invalid tail positions (windows that
        # run past the true sequence length for each filter size), max over time.
        act = jnp.maximum(acc + bconv_ref[...], 0.0)
        act = act.reshape(bt, l_pad, n_pad) * mask_ref[...][None, :, :]
        pooled = jnp.max(act, axis=1)                       # (Bt, N_pad) f32

        # TODO(synk): dropout(p=0.5) skipped (deterministic inference forward).
        logits = jnp.dot(pooled.astype(jnp.bfloat16), wfc_ref[...],
                         preferred_element_type=jnp.float32) + bfc_ref[...]
        out_ref[...] = logits.astype(out_ref.dtype)

    return kernel


def textcnn_forward(x_tokens, params, *, filter_sizes, batch_tile=64):
    """x_tokens: (B, T) int32 token ids. Returns (B, output_dim) float32 logits."""
    filter_sizes = tuple(int(f) for f in filter_sizes)
    fs_max, fs_min = max(filter_sizes), min(filter_sizes)
    n_convs = len(filter_sizes)

    embed = params["embed"]                                  # (vocab, E) f32
    _, E = embed.shape
    nf = params["w_conv0"].shape[2]
    out_dim = params["w_fc"].shape[1]
    B, T = x_tokens.shape

    # Lane-dense / tile-aligned padded sizes.
    E_pad = _round_up(E, 128)
    L = T - fs_min + 1                                       # longest valid conv length
    L_pad = _round_up(L, 16)                                 # bf16 sublane tile = 16
    T_pad = L_pad + fs_max - 1
    NF_total = n_convs * nf
    N_pad = _round_up(NF_total, 128)
    O_pad = _round_up(out_dim, 128)

    # Batch tiling (batch_tile should be a multiple of 8 when it actually tiles).
    b_tile = min(batch_tile, B)
    B_pad = _round_up(B, b_tile)
    grid = (B_pad // b_tile,)

    # --- embedding gather, emitted directly in bf16 with lane-dense E -----------
    # TODO(synk): gather itself is not fused into the kernel; emb crosses HBM once.
    embed_bf16 = jnp.pad(embed, ((0, 0), (0, E_pad - E))).astype(jnp.bfloat16)
    emb = jnp.take(embed_bf16, x_tokens, axis=0)             # (B, T, E_pad) bf16
    emb = jnp.pad(emb, ((0, B_pad - B), (0, T_pad - T), (0, 0)))

    # --- fuse all filter sizes into one padded conv weight / bias / mask --------
    w_blocks, b_blocks, m_blocks = [], [], []
    pos = jnp.arange(L_pad)
    for i, fs in enumerate(filter_sizes):
        w = params[f"w_conv{i}"]                             # (fs, E, nf)
        w_p = jnp.zeros((fs_max, E_pad, nf), jnp.float32).at[:fs, :E, :].set(w)
        w_blocks.append(w_p)
        b_blocks.append(params[f"b_conv{i}"].reshape(nf))
        valid = (pos < (T - fs + 1)).astype(jnp.float32)     # valid conv positions
        m_blocks.append(jnp.broadcast_to(valid[:, None], (L_pad, nf)))

    w_conv = jnp.concatenate(w_blocks, axis=2)               # (fs_max, E_pad, NF)
    w_conv = jnp.pad(w_conv, ((0, 0), (0, 0), (0, N_pad - NF_total)))
    w_conv = w_conv.reshape(fs_max * E_pad, N_pad).astype(jnp.bfloat16)

    b_conv = jnp.concatenate(b_blocks)[None, :]
    b_conv = jnp.pad(b_conv, ((0, 0), (0, N_pad - NF_total))).astype(jnp.float32)

    mask = jnp.concatenate(m_blocks, axis=1)
    mask = jnp.pad(mask, ((0, 0), (0, N_pad - NF_total))).astype(jnp.float32)

    w_fc = jnp.pad(params["w_fc"],
                   ((0, N_pad - NF_total), (0, O_pad - out_dim))).astype(jnp.bfloat16)
    b_fc = jnp.pad(params["b_fc"],
                   ((0, 0), (0, O_pad - out_dim))).astype(jnp.float32)

    kernel = _make_textcnn_kernel(fs_max, L_pad, E_pad, N_pad)

    k_dim = fs_max * E_pad
    flops = 2 * B_pad * L_pad * k_dim * N_pad + 2 * B_pad * N_pad * O_pad
    bytes_accessed = (emb.size * 2 + w_conv.size * 2 + b_conv.size * 4 +
                      mask.size * 4 + w_fc.size * 2 + b_fc.size * 4 +
                      B_pad * O_pad * 4)
    cost = pl.CostEstimate(flops=flops, transcendentals=0,
                           bytes_accessed=bytes_accessed)

    const2 = lambda b: (0, 0)
    grid_spec = pltpu.PrefetchScalarGridSpec(
        num_scalar_prefetch=0,
        grid=grid,
        in_specs=[
            pl.BlockSpec((b_tile, T_pad, E_pad), lambda b: (b, 0, 0)),  # emb (tiled)
            pl.BlockSpec((fs_max * E_pad, N_pad), const2),              # fused conv W
            pl.BlockSpec((1, N_pad), const2),                           # fused conv b
            pl.BlockSpec((L_pad, N_pad), const2),                       # validity mask
            pl.BlockSpec((N_pad, O_pad), const2),                       # fc W
            pl.BlockSpec((1, O_pad), const2),                           # fc b
        ],
        out_specs=pl.BlockSpec((b_tile, O_pad), lambda b: (b, 0)),
    )

    out = pl.pallas_call(
        kernel,
        out_shape=jax.ShapeDtypeStruct((B_pad, O_pad), jnp.float32),
        grid_spec=grid_spec,
        compiler_params=pltpu.CompilerParams(
            dimension_semantics=("parallel",),         # shard batch grid across TCs
            vmem_limit_bytes=48 * 1024 * 1024),        # fits v7x's 64 MiB VMEM
        cost_estimate=cost,
    )(emb, w_conv, b_conv, mask, w_fc, b_fc)

    return out[:B, :out_dim]


def textcnn_reference(x_tokens, params, *, filter_sizes):
    """Pure-JAX f32 reference matching the PyTorch forward (dropout = identity)."""
    emb = jnp.take(params["embed"], x_tokens, axis=0)        # (B, T, E) f32
    B, T, _ = emb.shape
    feats = []
    for i, fs in enumerate(filter_sizes):
        w = params[f"w_conv{i}"]                             # (fs, E, nf)
        b = params[f"b_conv{i}"][0]
        L = T - fs + 1
        acc = jnp.zeros((B, L, w.shape[2]), jnp.float32)
        for k in range(fs):
            acc = acc + jnp.einsum("ble,en->bln", emb[:, k:k + L, :], w[k])
        act = jnp.maximum(acc + b[None, None, :], 0.0)
        feats.append(jnp.max(act, axis=1))
    feat = jnp.concatenate(feats, axis=1)
    return feat @ params["w_fc"] + params["b_fc"]


def init_params(key, vocab_size, embedding_dim, n_filters, filter_sizes, output_dim):
    keys = jax.random.split(key, 2 + 2 * len(filter_sizes) + 2)
    params = {}
    params["embed"] = 0.1 * jax.random.normal(
        keys[0], (vocab_size, embedding_dim), jnp.float32)
    for i, fs in enumerate(filter_sizes):
        params[f"w_conv{i}"] = 0.1 * jax.random.normal(
            keys[1 + 2 * i], (fs, embedding_dim, n_filters), jnp.float32)
        params[f"b_conv{i}"] = 0.1 * jax.random.normal(
            keys[2 + 2 * i], (1, n_filters), jnp.float32)
    in_feat = len(filter_sizes) * n_filters
    params["w_fc"] = 0.1 * jax.random.normal(
        keys[-2], (in_feat, output_dim), jnp.float32)
    params["b_fc"] = 0.1 * jax.random.normal(
        keys[-1], (1, output_dim), jnp.float32)
    return params


if __name__ == "__main__":
    vocab_size = 50
    embedding_dim = 32
    n_filters = 8
    filter_sizes = (2, 3, 4)
    output_dim = 4
    batch = 2
    seq_len = 16

    root = jax.random.PRNGKey(0)
    k_params, k_x = jax.random.split(root)
    params = init_params(k_params, vocab_size, embedding_dim, n_filters,
                         filter_sizes, output_dim)
    x = jax.random.randint(k_x, (batch, seq_len), 0, vocab_size, dtype=jnp.int32)

    fwd = jax.jit(functools.partial(textcnn_forward, filter_sizes=filter_sizes))
    logits = fwd(x, params)
    jax.block_until_ready(logits)
    assert logits.shape == (batch, output_dim)

    ref = textcnn_reference(x, params, filter_sizes=filter_sizes)
    np.testing.assert_allclose(np.asarray(logits), np.asarray(ref),
                               rtol=5e-2, atol=5e-2)
    print("KERNEL_OK")
</pallas_src>

<mosaic_0001>
module attributes {stable_mosaic.version = 11 : i64} {
  func.func @kernel(%arg0: i32, %arg1: memref<2x19x128xbf16, #tpu.memory_space<vmem>>, %arg2: memref<512x128xbf16, #tpu.memory_space<vmem>>, %arg3: memref<1x128xf32, #tpu.memory_space<vmem>>, %arg4: memref<16x128xf32, #tpu.memory_space<vmem>>, %arg5: memref<128x128xbf16, #tpu.memory_space<vmem>>, %arg6: memref<1x128xf32, #tpu.memory_space<vmem>>, %arg7: memref<2x128xf32, #tpu.memory_space<vmem>>) attributes {dimension_semantics = [#tpu.dimension_semantics<parallel>], iteration_bounds = array<i64: 1>, scalar_prefetch = 0 : i64, scratch_operands = 0 : i64, tpu.core_type = #tpu.core_type<tc>, window_params = [{transform_indices = @transform_0, window_bounds = array<i64: 2, 19, 128>}, {pipeline_mode = #tpu.pipeline_mode<synchronous>, transform_indices = @transform_1, window_bounds = array<i64: 512, 128>}, {pipeline_mode = #tpu.pipeline_mode<synchronous>, transform_indices = @transform_2, window_bounds = array<i64: 1, 128>}, {pipeline_mode = #tpu.pipeline_mode<synchronous>, transform_indices = @transform_3, window_bounds = array<i64: 16, 128>}, {pipeline_mode = #tpu.pipeline_mode<synchronous>, transform_indices = @transform_4, window_bounds = array<i64: 128, 128>}, {pipeline_mode = #tpu.pipeline_mode<synchronous>, transform_indices = @transform_5, window_bounds = array<i64: 1, 128>}, {transform_indices = @transform_6, window_bounds = array<i64: 2, 128>}]} {
    %c0 = arith.constant 0 : index
    %c0_0 = arith.constant 0 : index
    %c0_1 = arith.constant 0 : index
    %0 = vector.load %arg1[%c0, %c0_0, %c0_1] : memref<2x19x128xbf16, #tpu.memory_space<vmem>>, vector<2x19x128xbf16>
    %1 = vector.extract_strided_slice %0 {offsets = [0, 0, 0], sizes = [2, 16, 128], strides = [1, 1, 1]} : vector<2x19x128xbf16> to vector<2x16x128xbf16>
    %2 = vector.extract_strided_slice %0 {offsets = [0, 1, 0], sizes = [2, 16, 128], strides = [1, 1, 1]} : vector<2x19x128xbf16> to vector<2x16x128xbf16>
    %3 = vector.extract_strided_slice %0 {offsets = [0, 2, 0], sizes = [2, 16, 128], strides = [1, 1, 1]} : vector<2x19x128xbf16> to vector<2x16x128xbf16>
    %4 = vector.extract_strided_slice %0 {offsets = [0, 3, 0], sizes = [2, 16, 128], strides = [1, 1, 1]} : vector<2x19x128xbf16> to vector<2x16x128xbf16>
    %5 = tpu.concatenate %1, %2, %3, %4 in 2 : vector<2x16x128xbf16>, vector<2x16x128xbf16>, vector<2x16x128xbf16>, vector<2x16x128xbf16> -> vector<2x16x512xbf16>
    %6 = vector.shape_cast %5 : vector<2x16x512xbf16> to vector<32x512xbf16>
    %c0_2 = arith.constant 0 : index
    %c0_3 = arith.constant 0 : index
    %7 = vector.load %arg2[%c0_2, %c0_3] : memref<512x128xbf16, #tpu.memory_space<vmem>>, vector<512x128xbf16>
    %cst = arith.constant dense<0.000000e+00> : vector<32x128xf32>
    %8 = tpu.matmul %6, %7, %cst {dimension_numbers = #tpu.dot_dimension_numbers<[1], [0], [0], [1], [0, 0, 1, 1], [], []>} : vector<32x512xbf16>, vector<512x128xbf16>, vector<32x128xf32> -> vector<32x128xf32>
    %c0_4 = arith.constant 0 : index
    %c0_5 = arith.constant 0 : index
    %9 = vector.load %arg3[%c0_4, %c0_5] : memref<1x128xf32, #tpu.memory_space<vmem>>, vector<1x128xf32>
    %10 = vector.broadcast %9 : vector<1x128xf32> to vector<32x128xf32>
    %11 = arith.addf %8, %10 : vector<32x128xf32>
    %cst_6 = arith.constant 0.000000e+00 : f32
    %12 = vector.broadcast %cst_6 : f32 to vector<32x128xf32>
    %13 = arith.maximumf %11, %12 : vector<32x128xf32>
    %14 = vector.shape_cast %13 : vector<32x128xf32> to vector<2x16x128xf32>
    %c0_7 = arith.constant 0 : index
    %c0_8 = arith.constant 0 : index
    %15 = vector.load %arg4[%c0_7, %c0_8] : memref<16x128xf32, #tpu.memory_space<vmem>>, vector<16x128xf32>
    %16 = vector.shape_cast %15 : vector<16x128xf32> to vector<1x16x128xf32>
    %17 = vector.broadcast %16 : vector<1x16x128xf32> to vector<2x16x128xf32>
    %18 = arith.mulf %14, %17 : vector<2x16x128xf32>
    %cst_9 = arith.constant dense<0xFF800000> : vector<2x128xf32>
    %19 = vector.multi_reduction <maximumf>, %18, %cst_9 [1] : vector<2x16x128xf32> to vector<2x128xf32>
    %20 = arith.truncf %19 : vector<2x128xf32> to vector<2x128xbf16>
    %c0_10 = arith.constant 0 : index
    %c0_11 = arith.constant 0 : index
    %21 = vector.load %arg5[%c0_10, %c0_11] : memref<128x128xbf16, #tpu.memory_space<vmem>>, vector<128x128xbf16>
    %cst_12 = arith.constant dense<0.000000e+00> : vector<2x128xf32>
    %22 = tpu.matmul %20, %21, %cst_12 {dimension_numbers = #tpu.dot_dimension_numbers<[1], [0], [0], [1], [0, 0, 1, 1], [], []>} : vector<2x128xbf16>, vector<128x128xbf16>, vector<2x128xf32> -> vector<2x128xf32>
    %c0_13 = arith.constant 0 : index
    %c0_14 = arith.constant 0 : index
    %23 = vector.load %arg6[%c0_13, %c0_14] : memref<1x128xf32, #tpu.memory_space<vmem>>, vector<1x128xf32>
    %24 = vector.broadcast %23 : vector<1x128xf32> to vector<2x128xf32>
    %25 = arith.addf %22, %24 : vector<2x128xf32>
    %c0_15 = arith.constant 0 : index
    %c0_16 = arith.constant 0 : index
    %26 = vector.load %arg7[%c0_15, %c0_16] : memref<2x128xf32, #tpu.memory_space<vmem>>, vector<2x128xf32>
    tpu.vector_store %arg7[%c0_15, %c0_16], %25 {strides = array<i32>} : memref<2x128xf32, #tpu.memory_space<vmem>>, vector<2x128xf32>,
    return
  }
  func.func @transform_0(%arg0: i32) -> (i32, i32, i32) {
    %c0_i32 = arith.constant 0 : i32
    %c0_i32_0 = arith.constant 0 : i32
    %c0_i32_1 = arith.constant 0 : i32
    return %arg0, %c0_i32, %c0_i32_0 : i32, i32, i32
  }
  func.func @transform_1(%arg0: i32) -> (i32, i32) {
    %c0_i32 = arith.constant 0 : i32
    %c0_i32_0 = arith.constant 0 : i32
    %c0_i32_1 = arith.constant 0 : i32
    return %c0_i32, %c0_i32_0 : i32, i32
  }
  func.func @transform_2(%arg0: i32) -> (i32, i32) {
    %c0_i32 = arith.constant 0 : i32
    %c0_i32_0 = arith.constant 0 : i32
    %c0_i32_1 = arith.constant 0 : i32
    return %c0_i32, %c0_i32_0 : i32, i32
  }
  func.func @transform_3(%arg0: i32) -> (i32, i32) {
    %c0_i32 = arith.constant 0 : i32
    %c0_i32_0 = arith.constant 0 : i32
    %c0_i32_1 = arith.constant 0 : i32
    return %c0_i32, %c0_i32_0 : i32, i32
  }
  func.func @transform_4(%arg0: i32) -> (i32, i32) {
    %c0_i32 = arith.constant 0 : i32
    %c0_i32_0 = arith.constant 0 : i32
    %c0_i32_1 = arith.constant 0 : i32
    return %c0_i32, %c0_i32_0 : i32, i32
  }
  func.func @transform_5(%arg0: i32) -> (i32, i32) {
    %c0_i32 = arith.constant 0 : i32
    %c0_i32_0 = arith.constant 0 : i32
    %c0_i32_1 = arith.constant 0 : i32
    return %c0_i32, %c0_i32_0 : i32, i32
  }
  func.func @transform_6(%arg0: i32) -> (i32, i32) {
    %c0_i32 = arith.constant 0 : i32
    %c0_i32_0 = arith.constant 0 : i32
    return %arg0, %c0_i32 : i32, i32
  }
}

</mosaic_0001>

<llo_original>
// kernel: textcnn_forward.1
$region0: #{textcnn_forward.1}
  #allocation0 [shape = 'u32[]', space=smem, size = 0x4, offset = 0x4, fixed_abs, tag = 'smem constant byte address 0x4 - core index']
  #allocation1 [shape = 'u32[72,128]{1,0:T(1,128)}', space=vmem, size = 0x9000, scoped, tag = 'internal scratch']
  %s0 = inlined_call_operand.vmem [shape: bf16[2,19,128], index: 0, kind: input, shape index: {}]
  %s1 = inlined_call_operand.vmem [shape: bf16[512,128], index: 1, kind: input, shape index: {}]
  %s2 = inlined_call_operand.vmem [shape: f32[1,128], index: 2, kind: input, shape index: {}]
  %s3 = inlined_call_operand.vmem [shape: f32[16,128], index: 3, kind: input, shape index: {}]
  %s4 = inlined_call_operand.vmem [shape: bf16[128,128], index: 4, kind: input, shape index: {}]
  %s5 = inlined_call_operand.vmem [shape: f32[1,128], index: 5, kind: input, shape index: {}]
  %s6 = inlined_call_operand.hbm [shape: f32[2,128], index: 6, kind: output, shape index: {}]
  %s7 = sld [smem:[#allocation0]]
  $region34: #{textcnn_forward.1} parent=0
    _
  %s9 = ssub.s32 1, %s7
  %s10 = scalar_select 0, %s9, %s7
  $region1: #{textcnn_forward.1} parent=0
    #allocation2 [shape = 'u8[1024]{0}', space=vmem, size = 0x400, scoped, tag = 'output window, operand 0, single buffered']
    #allocation3 [shape = 's32[1]{0}', space=sflag, size = 0x4, scoped, tag = 'scoped memory for textcnn_forward.1']
    %11 = vsyncpa [#allocation3], 0
    // Predicated region
    $region2: #{textcnn_forward.1} parent=1 // pred_check
      _
    $region3: #{textcnn_forward.1} parent=1 // pred_check_branch
      %13 = sbr.rel (0) target = $region5
    $region4: #{textcnn_forward.1} parent=1 // pred_region
      _
    $region5: #{textcnn_forward.1} parent=1 // pred_fallthru
      _
    // Predicated region
    $region6: #{textcnn_forward.1} parent=1 // pred_check
      _
    $region7: #{textcnn_forward.1} parent=1 // pred_check_branch
      %15 = sbr.rel (0) target = $region9
    $region8: #{textcnn_forward.1} parent=1 // pred_region
      _
    $region9: #{textcnn_forward.1} parent=1 // pred_fallthru
      _
    // Predicated region
    $region10: #{textcnn_forward.1} parent=1 // pred_check
      _
    $region11: #{textcnn_forward.1} parent=1 // pred_check_branch
      %17 = sbr.rel (0) target = $region13
    $region12: #{textcnn_forward.1} parent=1 // pred_region
      _
    $region13: #{textcnn_forward.1} parent=1 // pred_fallthru
      _
    // Predicated region
    $region14: #{textcnn_forward.1} parent=1 // pred_check
      _
    $region15: #{textcnn_forward.1} parent=1 // pred_check_branch
      %19 = sbr.rel (0) target = $region17
    $region16: #{textcnn_forward.1} parent=1 // pred_region
      _
    $region17: #{textcnn_forward.1} parent=1 // pred_fallthru
      _
    // Predicated region
    $region18: #{textcnn_forward.1} parent=1 // pred_check
      _
    $region19: #{textcnn_forward.1} parent=1 // pred_check_branch
      %21 = sbr.rel (0) target = $region21
    $region20: #{textcnn_forward.1} parent=1 // pred_region
      _
    $region21: #{textcnn_forward.1} parent=1 // pred_fallthru
      _
    // Predicated region
    $region22: #{textcnn_forward.1} parent=1 // pred_check
      _
    $region23: #{textcnn_forward.1} parent=1 // pred_check_branch
      %23 = sbr.rel (0) target = $region25
    $region24: #{textcnn_forward.1} parent=1 // pred_region
      _
    $region25: #{textcnn_forward.1} parent=1 // pred_fallthru
      _
    %v24 = vld [vmem:[%s0] sm:$0xf]
    %v25 = vld [vmem:[%s0 + $0x4] sm:$0xf]
    %v26 = vld [vmem:[%s0 + $0x8] sm:$0x3]
    %v27 = vld [vmem:[%s0 + $0xc] sm:$0xf]
    %v28 = vld [vmem:[%s0 + $0x10] sm:$0xf]
    %v29 = vld [vmem:[%s0 + $0x14] sm:$0x3]
    %v34 = vunpack.c.l.b16 %v24
    %v35 = vunpack.c.l.b16 %v25
    %v36 = vunpack.c.l.b16 %v27
    %v37 = vunpack.c.l.b16 %v28
    %v38 = vpack.c.b16 %v35, %v34
    %v39 = vpack.c.b16 %v37, %v36
    %v44 = vunpack.c.l.b16 %v26
    %v45 = vunpack.c.l.b16 %v29
    %v46 = vpack.c.b16 %v44, %v44
    %v47 = vpack.c.b16 %v45, %v45
    %vm48 = vsmask.f32 7424
    %v50 = vshrl.u32 %v38, 16
    %v52 = vshll.u32 %v38, 16
    %v54 = vrot.slane %v52, 1
    %v55 = vor.u32 %v50, %v54
    %v57 = vshll.u32 %v46, 16
    %v59 = vrot.slane %v57, 1
    %v60 = vsel %vm48, %v55, %v59
    %v62 = vshrl.u32 %v39, 16
    %v64 = vshll.u32 %v39, 16
    %v66 = vrot.slane %v64, 1
    %v67 = vor.u32 %v62, %v66
    %v69 = vshll.u32 %v47, 16
    %v71 = vrot.slane %v69, 1
    %v72 = vsel %vm48, %v67, %v71
    %vm75 = vcmask 1046528
    %v76 = vrot.slane %v38, 1
    %v77 = vrot.slane %v46, 1
    %v78 = vsel %vm75, %v76, %v77
    %v79 = vrot.slane %v39, 1
    %v80 = vrot.slane %v47, 1
    %v81 = vsel %vm75, %v79, %v80
    %vm84 = vsmask.f32 6400
    %v85 = vrot.slane %v50, 1
    %v86 = vrot.slane %v52, 2
    %v87 = vor.u32 %v85, %v86
    %v88 = vshrl.u32 %v46, 16
    %v90 = vrot.slane %v88, 1
    %v91 = vrot.slane %v57, 2
    %v92 = vor.u32 %v90, %v91
    %v93 = vsel %vm84, %v87, %v92
    %v94 = vrot.slane %v62, 1
    %v95 = vrot.slane %v64, 2
    %v96 = vor.u32 %v94, %v95
    %v97 = vshrl.u32 %v47, 16
    %v99 = vrot.slane %v97, 1
    %v100 = vrot.slane %v69, 2
    %v101 = vor.u32 %v99, %v100
    %v102 = vsel %vm84, %v96, %v101
    %v105 = vld [vmem:[%s1] sm:$0xf]
    %v106 = vld [vmem:[%s1 + $0x4] sm:$0xf]
    %v107 = vld [vmem:[%s1 + $0x8] sm:$0xf]
    %v108 = vld [vmem:[%s1 + $0xc] sm:$0xf]
    %v109 = vld [vmem:[%s1 + $0x10] sm:$0xf]
    %v110 = vld [vmem:[%s1 + $0x14] sm:$0xf]
    %v111 = vld [vmem:[%s1 + $0x18] sm:$0xf]
    %v112 = vld [vmem:[%s1 + $0x1c] sm:$0xf]
    %v113 = vld [vmem:[%s1 + $0x20] sm:$0xf]
    %v114 = vld [vmem:[%s1 + $0x24] sm:$0xf]
    %v115 = vld [vmem:[%s1 + $0x28] sm:$0xf]
    %v116 = vld [vmem:[%s1 + $0x2c] sm:$0xf]
    %v117 = vld [vmem:[%s1 + $0x30] sm:$0xf]
    %v118 = vld [vmem:[%s1 + $0x34] sm:$0xf]
    %v119 = vld [vmem:[%s1 + $0x38] sm:$0xf]
    %v120 = vld [vmem:[%s1 + $0x3c] sm:$0xf]
    %v121 = vld [vmem:[%s1 + $0x40] sm:$0xf]
    %v122 = vld [vmem:[%s1 + $0x44] sm:$0xf]
    %v123 = vld [vmem:[%s1 + $0x48] sm:$0xf]
    %v124 = vld [vmem:[%s1 + $0x4c] sm:$0xf]
    %v125 = vld [vmem:[%s1 + $0x50] sm:$0xf]
    %v126 = vld [vmem:[%s1 + $0x54] sm:$0xf]
    %v127 = vld [vmem:[%s1 + $0x58] sm:$0xf]
    %v128 = vld [vmem:[%s1 + $0x5c] sm:$0xf]
    %v129 = vld [vmem:[%s1 + $0x60] sm:$0xf]
    %v130 = vld [vmem:[%s1 + $0x64] sm:$0xf]
    %v131 = vld [vmem:[%s1 + $0x68] sm:$0xf]
    %v132 = vld [vmem:[%s1 + $0x6c] sm:$0xf]
    %v133 = vld [vmem:[%s1 + $0x70] sm:$0xf]
    %v134 = vld [vmem:[%s1 + $0x74] sm:$0xf]
    %v135 = vld [vmem:[%s1 + $0x78] sm:$0xf]
    %v136 = vld [vmem:[%s1 + $0x7c] sm:$0xf]
    %v137 = vld [vmem:[%s1 + $0x80] sm:$0xf]
    %v138 = vld [vmem:[%s1 + $0x84] sm:$0xf]
    %v139 = vld [vmem:[%s1 + $0x88] sm:$0xf]
    %v140 = vld [vmem:[%s1 + $0x8c] sm:$0xf]
    %v141 = vld [vmem:[%s1 + $0x90] sm:$0xf]
    %v142 = vld [vmem:[%s1 + $0x94] sm:$0xf]
    %v143 = vld [vmem:[%s1 + $0x98] sm:$0xf]
    %v144 = vld [vmem:[%s1 + $0x9c] sm:$0xf]
    %v145 = vld [vmem:[%s1 + $0xa0] sm:$0xf]
    %v146 = vld [vmem:[%s1 + $0xa4] sm:$0xf]
    %v147 = vld [vmem:[%s1 + $0xa8] sm:$0xf]
    %v148 = vld [vmem:[%s1 + $0xac] sm:$0xf]
    %v149 = vld [vmem:[%s1 + $0xb0] sm:$0xf]
    %v150 = vld [vmem:[%s1 + $0xb4] sm:$0xf]
    %v151 = vld [vmem:[%s1 + $0xb8] sm:$0xf]
    %v152 = vld [vmem:[%s1 + $0xbc] sm:$0xf]
    %v153 = vld [vmem:[%s1 + $0xc0] sm:$0xf]
    %v154 = vld [vmem:[%s1 + $0xc4] sm:$0xf]
    %v155 = vld [vmem:[%s1 + $0xc8] sm:$0xf]
    %v156 = vld [vmem:[%s1 + $0xcc] sm:$0xf]
    %v157 = vld [vmem:[%s1 + $0xd0] sm:$0xf]
    %v158 = vld [vmem:[%s1 + $0xd4] sm:$0xf]
    %v159 = vld [vmem:[%s1 + $0xd8] sm:$0xf]
    %v160 = vld [vmem:[%s1 + $0xdc] sm:$0xf]
    %v161 = vld [vmem:[%s1 + $0xe0] sm:$0xf]
    %v162 = vld [vmem:[%s1 + $0xe4] sm:$0xf]
    %v163 = vld [vmem:[%s1 + $0xe8] sm:$0xf]
    %v164 = vld [vmem:[%s1 + $0xec] sm:$0xf]
    %v165 = vld [vmem:[%s1 + $0xf0] sm:$0xf]
    %v166 = vld [vmem:[%s1 + $0xf4] sm:$0xf]
    %v167 = vld [vmem:[%s1 + $0xf8] sm:$0xf]
    %v168 = vld [vmem:[%s1 + $0xfc] sm:$0xf]
    %v169 = vld [vmem:[%s2] sm:$0x1]
    %v171 = vperm.slane %v169, 0
    %v237 = vunpack.c.l.b16 %v105
    %v238 = vunpack.c.l.b16 %v106
    %v239 = vunpack.c.l.b16 %v107
    %v240 = vunpack.c.l.b16 %v108
    %v241 = vunpack.c.l.b16 %v109
    %v242 = vunpack.c.l.b16 %v110
    %v243 = vunpack.c.l.b16 %v111
    %v244 = vunpack.c.l.b16 %v112
    %v245 = vunpack.c.l.b16 %v113
    %v246 = vunpack.c.l.b16 %v114
    %v247 = vunpack.c.l.b16 %v115
    %v248 = vunpack.c.l.b16 %v116
    %v249 = vunpack.c.l.b16 %v117
    %v250 = vunpack.c.l.b16 %v118
    %v251 = vunpack.c.l.b16 %v119
    %v252 = vunpack.c.l.b16 %v120
    %v253 = vunpack.c.l.b16 %v121
    %v254 = vunpack.c.l.b16 %v122
    %v255 = vunpack.c.l.b16 %v123
    %v256 = vunpack.c.l.b16 %v124
    %v257 = vunpack.c.l.b16 %v125
    %v258 = vunpack.c.l.b16 %v126
    %v259 = vunpack.c.l.b16 %v127
    %v260 = vunpack.c.l.b16 %v128
    %v261 = vunpack.c.l.b16 %v129
    %v262 = vunpack.c.l.b16 %v130
    %v263 = vunpack.c.l.b16 %v131
    %v264 = vunpack.c.l.b16 %v132
    %v265 = vunpack.c.l.b16 %v133
    %v266 = vunpack.c.l.b16 %v134
    %v267 = vunpack.c.l.b16 %v135
    %v268 = vunpack.c.l.b16 %v136
    %v269 = vunpack.c.l.b16 %v137
    %v270 = vunpack.c.l.b16 %v138
    %v271 = vunpack.c.l.b16 %v139
    %v272 = vunpack.c.l.b16 %v140
    %v273 = vunpack.c.l.b16 %v141
    %v274 = vunpack.c.l.b16 %v142
    %v275 = vunpack.c.l.b16 %v143
    %v276 = vunpack.c.l.b16 %v144
    %v277 = vunpack.c.l.b16 %v145
    %v278 = vunpack.c.l.b16 %v146
    %v279 = vunpack.c.l.b16 %v147
    %v280 = vunpack.c.l.b16 %v148
    %v281 = vunpack.c.l.b16 %v149
    %v282 = vunpack.c.l.b16 %v150
    %v283 = vunpack.c.l.b16 %v151
    %v284 = vunpack.c.l.b16 %v152
    %v285 = vunpack.c.l.b16 %v153
    %v286 = vunpack.c.l.b16 %v154
    %v287 = vunpack.c.l.b16 %v155
    %v288 = vunpack.c.l.b16 %v156
    %v289 = vunpack.c.l.b16 %v157
    %v290 = vunpack.c.l.b16 %v158
    %v291 = vunpack.c.l.b16 %v159
    %v292 = vunpack.c.l.b16 %v160
    %v293 = vunpack.c.l.b16 %v161
    %v294 = vunpack.c.l.b16 %v162
    %v295 = vunpack.c.l.b16 %v163
    %v296 = vunpack.c.l.b16 %v164
    %v297 = vunpack.c.l.b16 %v165
    %v298 = vunpack.c.l.b16 %v166
    %v299 = vunpack.c.l.b16 %v167
    %v300 = vunpack.c.l.b16 %v168
    %v301 = vpack.c.b16 %v238, %v237
    %v302 = vpack.c.b16 %v240, %v239
    %v303 = vpack.c.b16 %v242, %v241
    %v304 = vpack.c.b16 %v244, %v243
    %v305 = vpack.c.b16 %v246, %v245
    %v306 = vpack.c.b16 %v248, %v247
    %v307 = vpack.c.b16 %v250, %v249
    %v308 = vpack.c.b16 %v252, %v251
    %v309 = vpack.c.b16 %v254, %v253
    %v310 = vpack.c.b16 %v256, %v255
    %v311 = vpack.c.b16 %v258, %v257
    %v312 = vpack.c.b16 %v260, %v259
    %v313 = vpack.c.b16 %v262, %v261
    %v314 = vpack.c.b16 %v264, %v263
    %v315 = vpack.c.b16 %v266, %v265
    %v316 = vpack.c.b16 %v268, %v267
    %v317 = vpack.c.b16 %v270, %v269
    %v318 = vpack.c.b16 %v272, %v271
    %v319 = vpack.c.b16 %v274, %v273
    %v320 = vpack.c.b16 %v276, %v275
    %v321 = vpack.c.b16 %v278, %v277
    %v322 = vpack.c.b16 %v280, %v279
    %v323 = vpack.c.b16 %v282, %v281
    %v324 = vpack.c.b16 %v284, %v283
    %v325 = vpack.c.b16 %v286, %v285
    %v326 = vpack.c.b16 %v288, %v287
    %v327 = vpack.c.b16 %v290, %v289
    %v328 = vpack.c.b16 %v292, %v291
    %v329 = vpack.c.b16 %v294, %v293
    %v330 = vpack.c.b16 %v296, %v295
    %v331 = vpack.c.b16 %v298, %v297
    %v332 = vpack.c.b16 %v300, %v299
    %365 = vmatpush.bf16.msra.mxu0 %v308
    %366 = vmatpush.bf16.msra.mxu0 %v307
    %367 = vmatpush.bf16.msra.mxu0 %v306
    %368 = vmatpush.bf16.msra.mxu0 %v305
    %369 = vmatpush.bf16.msra.mxu0 %v304
    %370 = vmatpush.bf16.msra.mxu0 %v303
    %371 = vmatpush.bf16.msra.mxu0 %v302
    %372 = vmatpush.bf16.msra.mxu0 %v301
    %373 = vmatmul.bf16.gmra.mxu0 %v38
    %v374 = vpop.f32.mrf.mxu0
    %v375 = vadd.f32 %v171, %v374
    %v376 = vpop.f32.mrf.mxu0
    %v377 = vadd.f32 %v171, %v376
    %378 = vmatmul.bf16.gmra.mxu0 %v39
    %v379 = vpop.f32.mrf.mxu0
    %v380 = vadd.f32 %v171, %v379
    %v381 = vpop.f32.mrf.mxu0
    %v382 = vadd.f32 %v171, %v381
    %383 = vdwg.mxu0
    %384 = vmatpush.bf16.msra.mxu0 %v316
    %385 = vmatpush.bf16.msra.mxu0 %v315
    %386 = vmatpush.bf16.msra.mxu0 %v314
    %387 = vmatpush.bf16.msra.mxu0 %v313
    %388 = vmatpush.bf16.msra.mxu0 %v312
    %389 = vmatpush.bf16.msra.mxu0 %v311
    %390 = vmatpush.bf16.msra.mxu0 %v310
    %391 = vmatpush.bf16.msra.mxu0 %v309
    %392 = vmatmul.bf16.gmra.mxu0 %v60
    %v393 = vpop.f32.mrf.mxu0
    %v394 = vadd.f32 %v375, %v393
    %v395 = vpop.f32.mrf.mxu0
    %v396 = vadd.f32 %v377, %v395
    %397 = vmatmul.bf16.gmra.mxu0 %v72
    %v398 = vpop.f32.mrf.mxu0
    %v399 = vadd.f32 %v380, %v398
    %v400 = vpop.f32.mrf.mxu0
    %v401 = vadd.f32 %v382, %v400
    %402 = vdwg.mxu0
    %403 = vmatpush.bf16.msra.mxu0 %v324
    %404 = vmatpush.bf16.msra.mxu0 %v323
    %405 = vmatpush.bf16.msra.mxu0 %v322
    %406 = vmatpush.bf16.msra.mxu0 %v321
    %407 = vmatpush.bf16.msra.mxu0 %v320
    %408 = vmatpush.bf16.msra.mxu0 %v319
    %409 = vmatpush.bf16.msra.mxu0 %v318
    %410 = vmatpush.bf16.msra.mxu0 %v317
    %411 = vmatmul.bf16.gmra.mxu0 %v78
    %v412 = vpop.f32.mrf.mxu0
    %v413 = vadd.f32 %v394, %v412
    %v414 = vpop.f32.mrf.mxu0
    %v415 = vadd.f32 %v396, %v414
    %416 = vmatmul.bf16.gmra.mxu0 %v81
    %v417 = vpop.f32.mrf.mxu0
    %v418 = vadd.f32 %v399, %v417
    %v419 = vpop.f32.mrf.mxu0
    %v420 = vadd.f32 %v401, %v419
    %421 = vdwg.mxu0
    %422 = vmatpush.bf16.msra.mxu0 %v332
    %423 = vmatpush.bf16.msra.mxu0 %v331
    %424 = vmatpush.bf16.msra.mxu0 %v330
    %425 = vmatpush.bf16.msra.mxu0 %v329
    %426 = vmatpush.bf16.msra.mxu0 %v328
    %427 = vmatpush.bf16.msra.mxu0 %v327
    %428 = vmatpush.bf16.msra.mxu0 %v326
    %429 = vmatpush.bf16.msra.mxu0 %v325
    %430 = vmatmul.bf16.gmra.mxu0 %v93
    %v431 = vpop.f32.mrf.mxu0
    %v432 = vadd.f32 %v413, %v431
    %v433 = vpop.f32.mrf.mxu0
    %v434 = vadd.f32 %v415, %v433
    %435 = vmatmul.bf16.gmra.mxu0 %v102
    %v436 = vpop.f32.mrf.mxu0
    %v437 = vadd.f32 %v418, %v436
    %v438 = vpop.f32.mrf.mxu0
    %v439 = vadd.f32 %v420, %v438
    %440 = vdwg.mxu0
    %v441 = vmax.f32 %v432, 0.0
    %v442 = vmax.f32 %v434, 0.0
    %v443 = vmax.f32 %v437, 0.0
    %v444 = vmax.f32 %v439, 0.0
    %v445 = vld [vmem:[%s3] sm:$0xff]
    %v446 = vld [vmem:[%s3 + $0x8] sm:$0xff]
    %v447 = vmul.f32 %v441, %v445
    %v448 = vmul.f32 %v442, %v446
    %v449 = vmul.f32 %v443, %v445
    %v450 = vmul.f32 %v444, %v446
    %v451 = vmax.f32 %v447, %v448
    %v452 = vrot.slane %v451, 4
    %v453 = vmax.f32 %v451, %v452
    %v454 = vrot.slane %v453, 2
    %v455 = vmax.f32 %v453, %v454
    %v456 = vrot.slane %v455, 1
    %v457 = vmax.f32 %v455, %v456
    %v458 = vmax.f32 %v449, %v450
    %v459 = vrot.slane %v458, 4
    %v460 = vmax.f32 %v458, %v459
    %v461 = vrot.slane %v460, 2
    %v462 = vmax.f32 %v460, %v461
    %v463 = vrot.slane %v462, 1
    %v464 = vmax.f32 %v462, %v463
    %v465 = vpack.c.bf16 %v457, %v457
    %v466 = vpack.c.bf16 %v464, %v464
    %v467 = vld [vmem:[%s4] sm:$0xf]
    %v468 = vld [vmem:[%s4 + $0x4] sm:$0xf]
    %v469 = vld [vmem:[%s4 + $0x8] sm:$0xf]
    %v470 = vld [vmem:[%s4 + $0xc] sm:$0xf]
    %v471 = vld [vmem:[%s4 + $0x10] sm:$0xf]
    %v472 = vld [vmem:[%s4 + $0x14] sm:$0xf]
    %v473 = vld [vmem:[%s4 + $0x18] sm:$0xf]
    %v474 = vld [vmem:[%s4 + $0x1c] sm:$0xf]
    %v475 = vld [vmem:[%s4 + $0x20] sm:$0xf]
    %v476 = vld [vmem:[%s4 + $0x24] sm:$0xf]
    %v477 = vld [vmem:[%s4 + $0x28] sm:$0xf]
    %v478 = vld [vmem:[%s4 + $0x2c] sm:$0xf]
    %v479 = vld [vmem:[%s4 + $0x30] sm:$0xf]
    %v480 = vld [vmem:[%s4 + $0x34] sm:$0xf]
    %v481 = vld [vmem:[%s4 + $0x38] sm:$0xf]
    %v482 = vld [vmem:[%s4 + $0x3c] sm:$0xf]
    %v483 = vld [vmem:[%s5] sm:$0x1]
    %v485 = vperm.slane %v483, 0
    %v489 = vunpack.c.l.b16 %v465
    %v490 = vunpack.c.l.b16 %v466
    %vm491 = vcmask 1041409
    %v492 = vsel %vm491, %v490, %v489
    %v493 = vpack.c.b16 %v492, %v492
    %v511 = vunpack.c.l.b16 %v467
    %v512 = vunpack.c.l.b16 %v468
    %v513 = vunpack.c.l.b16 %v469
    %v514 = vunpack.c.l.b16 %v470
    %v515 = vunpack.c.l.b16 %v471
    %v516 = vunpack.c.l.b16 %v472
    %v517 = vunpack.c.l.b16 %v473
    %v518 = vunpack.c.l.b16 %v474
    %v519 = vunpack.c.l.b16 %v475
    %v520 = vunpack.c.l.b16 %v476
    %v521 = vunpack.c.l.b16 %v477
    %v522 = vunpack.c.l.b16 %v478
    %v523 = vunpack.c.l.b16 %v479
    %v524 = vunpack.c.l.b16 %v480
    %v525 = vunpack.c.l.b16 %v481
    %v526 = vunpack.c.l.b16 %v482
    %v527 = vpack.c.b16 %v512, %v511
    %v528 = vpack.c.b16 %v514, %v513
    %v529 = vpack.c.b16 %v516, %v515
    %v530 = vpack.c.b16 %v518, %v517
    %v531 = vpack.c.b16 %v520, %v519
    %v532 = vpack.c.b16 %v522, %v521
    %v533 = vpack.c.b16 %v524, %v523
    %v534 = vpack.c.b16 %v526, %v525
    %543 = vmatpush.bf16.msra.mxu0 %v534
    %544 = vmatpush.bf16.msra.mxu0 %v533
    %545 = vmatpush.bf16.msra.mxu0 %v532
    %546 = vmatpush.bf16.msra.mxu0 %v531
    %547 = vmatpush.bf16.msra.mxu0 %v530
    %548 = vmatpush.bf16.msra.mxu0 %v529
    %549 = vmatpush.bf16.msra.mxu0 %v528
    %550 = vmatpush.bf16.msra.mxu0 %v527
    %551 = vmatmul.bf16.gmra.mxu0 %v493
    %v552 = vpop.f32.mrf.mxu0
    %v553 = vadd.f32 %v485, %v552
    %v554 = vpop.f32.mrf.mxu0
    %555 = vdwg.mxu0
    %556 = vst [vmem:[#allocation2] sm:$0x3] %v553
    // Predicated region
    $region26: #{textcnn_forward.1} parent=1 // pred_check
      _
    $region27: #{textcnn_forward.1} parent=1 // pred_check_branch
      %558 = sbr.rel (0) target = $region29
    $region28: #{textcnn_forward.1} parent=1 // pred_region
      %560 = vsyncadd [#allocation3], 0
      %s562 = sshll.u32 [#allocation2], 4
      %s563 = int_to_ptr.vmem [resolvable:$true] %s562
      %s564 = sshll.u32 %s6, 4
      %s565 = int_to_ptr.hbm [resolvable:$true] %s564
      %567 = dma.vmem_to_hbm [thread:$0]  %s563, 32, %s565, [#allocation3]
    $region29: #{textcnn_forward.1} parent=1 // pred_fallthru
      _
    // Predicated region
    $region30: #{textcnn_forward.1} parent=1 // pred_check
      _
    $region31: #{textcnn_forward.1} parent=1 // pred_check_branch
      %569 = sbr.rel (0) target = $region33
    $region32: #{textcnn_forward.1} parent=1 // pred_region
      %571 = dma.done [#allocation3], 32
    $region33: #{textcnn_forward.1} parent=1 // pred_fallthru
      _
    %572 = vsyncpa [#allocation3], 1

</llo_original>
